<compile_context>
chip_gen: v5e
topology: v5e:2x2
jax: 0.10.0
libtpu: 0.0.40
codegen_flags: <defaults>
</compile_context>

<pallas_src>
import math

import numpy as np
import jax
import jax.numpy as jnp
from jax import lax
from jax.experimental import pallas as pl
from jax.experimental.pallas import tpu as pltpu


def _round_up_128(x):
    return ((x + 127) // 128) * 128


def _pick_col_tile(padded):
    for cand in (2048, 1024, 512, 256, 128):
        if padded % cand == 0:
            return cand
    return padded


# ---------------------------------------------------------------------------
# Kernel 1: pixel normalization  o = x * (1/std) + (-mean/std)   (single FMA)
# ---------------------------------------------------------------------------
def _normalize_kernel(x_ref, scale_ref, bias_ref, o_ref):
    o_ref[...] = x_ref[...] * scale_ref[...] + bias_ref[...]


def normalize_images(images, pixel_mean, pixel_std):
    T, C, H, W = images.shape
    HW = H * W
    x = images.reshape(T * C, HW).astype(jnp.float32)

    std = pixel_std.astype(jnp.float32).reshape(1, C)
    mean = pixel_mean.astype(jnp.float32).reshape(1, C)
    scale_rows = jnp.tile(1.0 / std, (T, 1)).reshape(T * C, 1)
    bias_rows = jnp.tile(-mean / std, (T, 1)).reshape(T * C, 1)

    HWp = _round_up_128(HW)
    if HWp != HW:
        x = jnp.pad(x, ((0, 0), (0, HWp - HW)))
    col_tile = _pick_col_tile(HWp)

    out = pl.pallas_call(
        _normalize_kernel,
        out_shape=jax.ShapeDtypeStruct((T * C, HWp), jnp.float32),
        grid=(HWp // col_tile,),
        in_specs=[
            pl.BlockSpec((T * C, col_tile), lambda j: (0, j)),
            pl.BlockSpec((T * C, 1), lambda j: (0, 0)),
            pl.BlockSpec((T * C, 1), lambda j: (0, 0)),
        ],
        out_specs=pl.BlockSpec((T * C, col_tile), lambda j: (0, j)),
        compiler_params=pltpu.CompilerParams(dimension_semantics=("parallel",)),
    )(x, scale_rows, bias_rows)
    return out[:, :HW].reshape(T, C, H, W)


# ---------------------------------------------------------------------------
# Kernel 2 (fused per-frame): both Memorybank.get() reductions + L2-normalize
#                             + appearance-weighted cosine cost matrix.
#   cost = (1-w) * cos(cur, tgt) + w * cos(cur_app, tgt_app)
#        = [sqrt(1-w)*cur | sqrt(w)*cur_app] @ [sqrt(1-w)*tgt | sqrt(w)*tgt_app]^T
# The current-frame embeddings are selected out of the full (T, Q, C) arrays
# via the scalar-prefetched frame index in the index_map.
# ---------------------------------------------------------------------------
def _make_cost_kernel(appearance_weight, bank_size):
    s_main = math.sqrt(max(1.0 - float(appearance_weight), 0.0))
    s_app = math.sqrt(max(float(appearance_weight), 0.0))
    B = bank_size

    def _bank_get(bank_ref, score_ref, inv_size, size):
        # bank_ref: (B, Q, C); score_ref: (B, Q, 1); newest entry at slot 0.
        # temporal weight for slot b is (b+1)/size; slots >= size are masked.
        num = None
        den = None
        for b in range(B):  # static unroll, B is tiny (5)
            tw = (float(b) + 1.0) * inv_size
            wb = jnp.where(b < size, tw + score_ref[b], 0.0)       # (Q, 1)
            contrib = bank_ref[b] * wb                              # (Q, C)
            num = contrib if num is None else num + contrib
            den = wb if den is None else den + wb
        return num * (1.0 / den)

    def _l2norm(v):
        return v * lax.rsqrt(jnp.sum(v * v, axis=-1, keepdims=True) + 1e-24)

    def kernel(s_ref, rbank_ref, rscore_ref, abank_ref, ascore_ref,
               reid_ref, app_ref, o_ref):
        size = s_ref[0]
        inv_size = 1.0 / size.astype(jnp.float32)

        tgt = _l2norm(_bank_get(rbank_ref, rscore_ref, inv_size, size))
        tgt_a = _l2norm(_bank_get(abank_ref, ascore_ref, inv_size, size))
        cur = _l2norm(reid_ref[0])
        cur_a = _l2norm(app_ref[0])

        cur_cat = jnp.concatenate([cur * s_main, cur_a * s_app], axis=-1)   # (Q, 2C)
        tgt_cat = jnp.concatenate([tgt * s_main, tgt_a * s_app], axis=-1)   # (Q, 2C)
        dn = (((1,), (1,)), ((), ()))  # contract hidden -> (Q_cur, Q_tgt)
        o_ref[...] = lax.dot_general(cur_cat, tgt_cat, dn,
                                     preferred_element_type=jnp.float32)

    return kernel


def make_fused_cost_fn(bank_size, num_queries, hidden_dim, appearance_weight):
    B, Q, C = bank_size, num_queries, hidden_dim
    kernel = _make_cost_kernel(appearance_weight, B)
    grid_spec = pltpu.PrefetchScalarGridSpec(
        num_scalar_prefetch=1,          # int32 (2,) = [bank_size_in_use, frame]
        grid=(1,),
        in_specs=[
            pl.BlockSpec((B, Q, C), lambda i, s: (0, 0, 0)),    # reid bank
            pl.BlockSpec((B, Q, 1), lambda i, s: (0, 0, 0)),    # reid scores
            pl.BlockSpec((B, Q, C), lambda i, s: (0, 0, 0)),    # appearance bank
            pl.BlockSpec((B, Q, 1), lambda i, s: (0, 0, 0)),    # appearance scores
            pl.BlockSpec((1, Q, C), lambda i, s: (s[1], 0, 0)),  # reid_all[frame]
            pl.BlockSpec((1, Q, C), lambda i, s: (s[1], 0, 0)),  # app_all[frame]
        ],
        out_specs=pl.BlockSpec((Q, Q), lambda i, s: (0, 0)),
    )
    call = pl.pallas_call(
        kernel,
        out_shape=jax.ShapeDtypeStruct((Q, Q), jnp.float32),
        grid_spec=grid_spec,
        compiler_params=pltpu.CompilerParams(dimension_semantics=("arbitrary",)),
    )

    @jax.jit
    def fn(scalars, rbank, rscore, abank, ascore, reid_all, app_all):
        return call(scalars, rbank, rscore, abank, ascore, reid_all, app_all)

    return fn


# ---------------------------------------------------------------------------
# Kernel 3 (fused per-frame): one-hot gather of (logits, reid, app, masks) by
# the assignment indices + softmax-excl-background max score + memory bank
# roll/update — all in one kernel.  The mask gather streams lane-dense column
# tiles of the flattened spatial axis; the per-frame scalar work happens only
# on the first grid step.
# ---------------------------------------------------------------------------
def _make_post_kernel(bank_size):
    B = bank_size

    def kernel(f_ref, idx_ref, logit_ref, reid_ref, app_ref,
               rbank_ref, rscore_ref, abank_ref, ascore_ref, mask_ref,
               glog_ref, nrbank_ref, nrscore_ref, nabank_ref, nascore_ref,
               gmask_ref):
        Q = glog_ref.shape[0]
        onehot = (idx_ref[...] ==
                  lax.broadcasted_iota(jnp.int32, (Q, Q), 1)).astype(jnp.float32)

        # mask row gather for this spatial column tile (runs every grid step)
        gmask_ref[...] = jnp.dot(onehot, mask_ref[0],
                                 preferred_element_type=jnp.float32)

        @pl.when(pl.program_id(0) == 0)
        def _():
            glog = jnp.dot(onehot, logit_ref[0],
                           preferred_element_type=jnp.float32)        # (Q, K+1)
            greid = jnp.dot(onehot, reid_ref[0],
                            preferred_element_type=jnp.float32)        # (Q, C)
            gapp = jnp.dot(onehot, app_ref[0],
                           preferred_element_type=jnp.float32)         # (Q, C)
            glog_ref[...] = glog

            # max over softmax(glog)[:, :-1] without materializing full softmax
            K1 = glog.shape[-1]
            m = jnp.max(glog, axis=-1, keepdims=True)
            e = jnp.exp(glog - m)
            inv_den = pl.reciprocal(jnp.sum(e, axis=-1, keepdims=True),
                                    approx=True)
            kcol = lax.broadcasted_iota(jnp.int32, glog.shape, 1)
            e_fg = jnp.where(kcol < (K1 - 1), e, 0.0)
            mscore = jnp.max(e_fg, axis=-1, keepdims=True) * inv_den   # (Q, 1)

            # memory bank roll + update (newest entry goes to slot 0)
            nrbank_ref[0] = greid
            nabank_ref[0] = gapp
            nrscore_ref[0] = mscore
            nascore_ref[0] = mscore
            nrbank_ref[pl.ds(1, B - 1)] = rbank_ref[pl.ds(0, B - 1)]
            nabank_ref[pl.ds(1, B - 1)] = abank_ref[pl.ds(0, B - 1)]
            nrscore_ref[pl.ds(1, B - 1)] = rscore_ref[pl.ds(0, B - 1)]
            nascore_ref[pl.ds(1, B - 1)] = ascore_ref[pl.ds(0, B - 1)]

    return kernel


def make_post_match_fn(num_queries, num_classes_plus1, hidden_dim, bank_size,
                       hw_padded, col_tile):
    Q, K1, C, B = num_queries, num_classes_plus1, hidden_dim, bank_size
    kernel = _make_post_kernel(B)
    grid_spec = pltpu.PrefetchScalarGridSpec(
        num_scalar_prefetch=1,          # int32 (1,) = [frame]
        grid=(hw_padded // col_tile,),
        in_specs=[
            pl.BlockSpec((Q, 1), lambda j, f: (0, 0)),               # assignment
            pl.BlockSpec((1, Q, K1), lambda j, f: (f[0], 0, 0)),     # logits[frame]
            pl.BlockSpec((1, Q, C), lambda j, f: (f[0], 0, 0)),      # reid[frame]
            pl.BlockSpec((1, Q, C), lambda j, f: (f[0], 0, 0)),      # app[frame]
            pl.BlockSpec((B, Q, C), lambda j, f: (0, 0, 0)),         # reid bank
            pl.BlockSpec((B, Q, 1), lambda j, f: (0, 0, 0)),         # reid scores
            pl.BlockSpec((B, Q, C), lambda j, f: (0, 0, 0)),         # app bank
            pl.BlockSpec((B, Q, 1), lambda j, f: (0, 0, 0)),         # app scores
            pl.BlockSpec((1, Q, col_tile), lambda j, f: (f[0], 0, j)),  # masks[frame]
        ],
        out_specs=(
            pl.BlockSpec((Q, K1), lambda j, f: (0, 0)),              # gathered logits
            pl.BlockSpec((B, Q, C), lambda j, f: (0, 0, 0)),         # new reid bank
            pl.BlockSpec((B, Q, 1), lambda j, f: (0, 0, 0)),         # new reid scores
            pl.BlockSpec((B, Q, C), lambda j, f: (0, 0, 0)),         # new app bank
            pl.BlockSpec((B, Q, 1), lambda j, f: (0, 0, 0)),         # new app scores
            pl.BlockSpec((Q, col_tile), lambda j, f: (0, j)),        # gathered masks
        ),
    )
    call = pl.pallas_call(
        kernel,
        out_shape=(jax.ShapeDtypeStruct((Q, K1), jnp.float32),
                   jax.ShapeDtypeStruct((B, Q, C), jnp.float32),
                   jax.ShapeDtypeStruct((B, Q, 1), jnp.float32),
                   jax.ShapeDtypeStruct((B, Q, C), jnp.float32),
                   jax.ShapeDtypeStruct((B, Q, 1), jnp.float32),
                   jax.ShapeDtypeStruct((Q, hw_padded), jnp.float32)),
        grid_spec=grid_spec,
        compiler_params=pltpu.CompilerParams(dimension_semantics=("arbitrary",)),
    )

    @jax.jit
    def fn(frame, idx, logits_all, reid_all, app_all,
           rbank, rscore, abank, ascore, masks_flat):
        return call(frame, idx, logits_all, reid_all, app_all,
                    rbank, rscore, abank, ascore, masks_flat)

    return fn


# ---------------------------------------------------------------------------
# Memorybank — all state lives on device; the roll/update happens inside the
# fused post-match kernel, this object just holds the resulting arrays.
# ---------------------------------------------------------------------------
class Memorybank:
    def __init__(self, num_queries, hidden_dim, bank_size=5):
        self.bank_size = bank_size
        self.num_queries = num_queries
        self.hidden_dim = hidden_dim
        self.size = 0
        self.memory_bank = jnp.zeros((bank_size, num_queries, hidden_dim), jnp.float32)
        self.scores = jnp.zeros((bank_size, num_queries, 1), jnp.float32)

    def reset(self):
        self.memory_bank = jnp.zeros_like(self.memory_bank)
        self.scores = jnp.zeros_like(self.scores)
        self.size = 0

    def set_state(self, new_bank, new_scores):
        self.memory_bank = new_bank
        self.scores = new_scores
        self.size = min(self.size + 1, self.bank_size)


# ---------------------------------------------------------------------------
# Hungarian assignment (host) — matches VISAGE's `C.cpu()` + linear_sum_assignment
# ---------------------------------------------------------------------------
def _linear_assignment(C):
    # TODO(synk): scipy Hungarian solve has no Pallas equivalent; this is the
    # single remaining host sync in the per-frame loop.
    Ct = np.asarray(C).T
    try:
        from scipy.optimize import linear_sum_assignment
        rows, cols = linear_sum_assignment(Ct, maximize=True)
        return cols[np.argsort(rows)]
    except Exception:
        # greedy-maximize fallback if scipy unavailable
        Qr, Qc = Ct.shape
        out = np.zeros(Qr, dtype=np.int64)
        used = np.zeros(Qc, dtype=bool)
        for r in range(Qr):
            row = Ct[r].copy()
            row[used] = -np.inf
            j = int(np.argmax(row))
            out[r] = j
            used[j] = True
        return out


# ---------------------------------------------------------------------------
# VISAGE inference-path wrapper
# ---------------------------------------------------------------------------
class VISAGEPallas:
    def __init__(self, *, num_queries, hidden_dim, num_classes,
                 appearance_weight, pixel_mean, pixel_std, bank_size=5):
        self.num_queries = num_queries
        self.hidden_dim = hidden_dim
        self.num_classes = num_classes
        self.appearance_weight = appearance_weight
        self.pixel_mean = pixel_mean
        self.pixel_std = pixel_std
        self.bank_size = bank_size
        self.memory_bank = Memorybank(num_queries, hidden_dim, bank_size)
        self.appearance_memory_bank = Memorybank(num_queries, hidden_dim, bank_size)
        self._cost_fn = make_fused_cost_fn(bank_size, num_queries, hidden_dim,
                                           appearance_weight)
        self._post_cache = {}
        self._identity_idx = jnp.arange(num_queries, dtype=jnp.int32).reshape(
            num_queries, 1)

    def normalize(self, images):
        return normalize_images(images, self.pixel_mean, self.pixel_std)

    def _post_fn_for(self, hw_padded, col_tile):
        key = (hw_padded, col_tile)
        if key not in self._post_cache:
            self._post_cache[key] = make_post_match_fn(
                self.num_queries, self.num_classes + 1, self.hidden_dim,
                self.bank_size, hw_padded, col_tile)
        return self._post_cache[key]

    def _run_post(self, post_fn, frame_idx, idx, pred_logits, reid_all, app_all,
                  masks_flat):
        frame = jnp.array([frame_idx], jnp.int32)
        glog, nrbank, nrscore, nabank, nascore, gmask = post_fn(
            frame, idx, pred_logits, reid_all, app_all,
            self.memory_bank.memory_bank, self.memory_bank.scores,
            self.appearance_memory_bank.memory_bank,
            self.appearance_memory_bank.scores,
            masks_flat)
        self.memory_bank.set_state(nrbank, nrscore)
        self.appearance_memory_bank.set_state(nabank, nascore)
        return glog, gmask

    def post_processing(self, outputs, reid_queries, appearance_queries):
        pred_logits = jnp.asarray(outputs['pred_logits'][0], jnp.float32)      # (T, Q, K+1)
        pred_masks = jnp.transpose(jnp.asarray(outputs['pred_masks'][0],
                                               jnp.float32), (1, 0, 2, 3))     # (T, Q, Hm, Wm)
        reid_all = jnp.asarray(reid_queries[0], jnp.float32)                   # (T, Q, C)
        app_all = jnp.asarray(appearance_queries[0], jnp.float32)              # (T, Q, C)

        T, Q, _ = pred_logits.shape
        Hm, Wm = pred_masks.shape[-2:]
        HW = Hm * Wm
        HWp = _round_up_128(HW)
        col_tile = _pick_col_tile(HWp)
        post_fn = self._post_fn_for(HWp, col_tile)

        masks_flat = pred_masks.reshape(T, Q, HW)
        if HWp != HW:
            masks_flat = jnp.pad(masks_flat, ((0, 0), (0, 0), (0, HWp - HW)))

        self.memory_bank.reset()
        self.appearance_memory_bank.reset()

        out_logits, out_masks = [], []

        # frame 0: identity assignment -> fused gather + score + bank update
        glog, gmask = self._run_post(post_fn, 0, self._identity_idx,
                                     pred_logits, reid_all, app_all, masks_flat)
        out_logits.append(glog)
        out_masks.append(gmask)

        for i in range(1, T):
            scalars = jnp.array([self.memory_bank.size, i], jnp.int32)
            Cmat = self._cost_fn(scalars,
                                 self.memory_bank.memory_bank,
                                 self.memory_bank.scores,
                                 self.appearance_memory_bank.memory_bank,
                                 self.appearance_memory_bank.scores,
                                 reid_all, app_all)                           # 1 fused kernel
            indices = _linear_assignment(Cmat)                                # host Hungarian
            idx = jnp.asarray(np.asarray(indices).reshape(Q, 1), jnp.int32)
            glog, gmask = self._run_post(post_fn, i, idx, pred_logits,
                                         reid_all, app_all, masks_flat)       # 1 fused kernel
            out_logits.append(glog)
            out_masks.append(gmask)

        out_logits_avg = jnp.mean(jnp.stack(out_logits, axis=0), axis=0)       # (Q, K+1)
        out_masks_stacked = jnp.stack(out_masks, axis=1)[:, :, :HW].reshape(
            Q, T, Hm, Wm)                                                       # (Q, T, Hm, Wm)
        outputs = dict(outputs)
        outputs['pred_logits'] = out_logits_avg[None]                           # (1, Q, K+1)
        outputs['pred_masks'] = out_masks_stacked[None]                         # (1, Q, T, Hm, Wm)
        return outputs


if __name__ == "__main__":
    key = jax.random.PRNGKey(0)
    T, Cimg, H, W = 3, 3, 16, 16        # frames, image channels, spatial
    Q, HID, K = 8, 32, 4                # num_queries, hidden_dim, num_classes
    Hm, Wm = 8, 8                       # mask resolution

    keys = jax.random.split(key, 6)
    images = jax.random.uniform(keys[0], (T, Cimg, H, W), minval=0.0, maxval=255.0)
    pixel_mean = jnp.array([123.675, 116.28, 103.53], jnp.float32)
    pixel_std = jnp.array([58.395, 57.12, 57.375], jnp.float32)

    model = VISAGEPallas(num_queries=Q, hidden_dim=HID, num_classes=K,
                         appearance_weight=0.5,
                         pixel_mean=pixel_mean, pixel_std=pixel_std)

    # 1) pixel normalization (forward preamble), Pallas FMA kernel
    norm_images = model.normalize(images)

    # TODO(synk): backbone / sem_seg_head / criterion / appearance_decoder are
    # external detectron2 modules not provided; outputs synthesized here.
    pred_logits = jax.random.normal(keys[1], (1, T, Q, K + 1), jnp.float32)
    pred_masks = jax.random.normal(keys[2], (1, Q, T, Hm, Wm), jnp.float32)
    pred_embds = jax.random.normal(keys[3], (1, T, Q, HID), jnp.float32)
    reid_queries = jax.random.normal(keys[4], (1, T, Q, HID), jnp.float32)
    appearance_queries = jax.random.normal(keys[5], (1, T, Q, HID), jnp.float32)

    # 2) inference post-processing (fused per-frame Pallas kernels)
    outputs = model.post_processing(
        {'pred_logits': pred_logits, 'pred_masks': pred_masks, 'pred_embds': pred_embds},
        reid_queries, appearance_queries)

    # TODO(synk): inference_video (bilinear interpolate + topk to final size) not implemented.

    jax.block_until_ready((norm_images, outputs['pred_logits'], outputs['pred_masks']))
    assert norm_images.shape == (T, Cimg, H, W)
    assert outputs['pred_logits'].shape == (1, Q, K + 1)
    assert outputs['pred_masks'].shape == (1, Q, T, Hm, Wm)
    assert bool(jnp.all(jnp.isfinite(outputs['pred_logits'])))
    assert bool(jnp.all(jnp.isfinite(outputs['pred_masks'])))
    print("KERNEL_OK")
</pallas_src>

<mosaic_0001>
module attributes {stable_mosaic.version = 11 : i64} {
  func.func @_normalize_kernel(%arg0: i32, %arg1: memref<9x256xf32, #tpu.memory_space<vmem>>, %arg2: memref<9x1xf32, #tpu.memory_space<vmem>>, %arg3: memref<9x1xf32, #tpu.memory_space<vmem>>, %arg4: memref<9x256xf32, #tpu.memory_space<vmem>>) attributes {dimension_semantics = [#tpu.dimension_semantics<parallel>], iteration_bounds = array<i64: 1>, scalar_prefetch = 0 : i64, scratch_operands = 0 : i64, tpu.core_type = #tpu.core_type<tc>, window_params = [{transform_indices = @transform_0, window_bounds = array<i64: 9, 256>}, {pipeline_mode = #tpu.pipeline_mode<synchronous>, transform_indices = @transform_1, window_bounds = array<i64: 9, 1>}, {pipeline_mode = #tpu.pipeline_mode<synchronous>, transform_indices = @transform_2, window_bounds = array<i64: 9, 1>}, {transform_indices = @transform_3, window_bounds = array<i64: 9, 256>}]} {
    %c0 = arith.constant 0 : index
    %c0_0 = arith.constant 0 : index
    %0 = vector.load %arg1[%c0, %c0_0] : memref<9x256xf32, #tpu.memory_space<vmem>>, vector<9x256xf32>
    %c0_1 = arith.constant 0 : index
    %c0_2 = arith.constant 0 : index
    %1 = vector.load %arg2[%c0_1, %c0_2] : memref<9x1xf32, #tpu.memory_space<vmem>>, vector<9x1xf32>
    %2 = vector.broadcast %1 : vector<9x1xf32> to vector<9x256xf32>
    %3 = arith.mulf %0, %2 : vector<9x256xf32>
    %c0_3 = arith.constant 0 : index
    %c0_4 = arith.constant 0 : index
    %4 = vector.load %arg3[%c0_3, %c0_4] : memref<9x1xf32, #tpu.memory_space<vmem>>, vector<9x1xf32>
    %5 = vector.broadcast %4 : vector<9x1xf32> to vector<9x256xf32>
    %6 = arith.addf %3, %5 : vector<9x256xf32>
    %c0_5 = arith.constant 0 : index
    %c0_6 = arith.constant 0 : index
    %7 = vector.load %arg4[%c0_5, %c0_6] : memref<9x256xf32, #tpu.memory_space<vmem>>, vector<9x256xf32>
    tpu.vector_store %arg4[%c0_5, %c0_6], %6 {strides = array<i32>} : memref<9x256xf32, #tpu.memory_space<vmem>>, vector<9x256xf32>,
    return
  }
  func.func @transform_0(%arg0: i32) -> (i32, i32) {
    %c0_i32 = arith.constant 0 : i32
    %c0_i32_0 = arith.constant 0 : i32
    return %c0_i32, %arg0 : i32, i32
  }
  func.func @transform_1(%arg0: i32) -> (i32, i32) {
    %c0_i32 = arith.constant 0 : i32
    %c0_i32_0 = arith.constant 0 : i32
    %c0_i32_1 = arith.constant 0 : i32
    return %c0_i32, %c0_i32_0 : i32, i32
  }
  func.func @transform_2(%arg0: i32) -> (i32, i32) {
    %c0_i32 = arith.constant 0 : i32
    %c0_i32_0 = arith.constant 0 : i32
    %c0_i32_1 = arith.constant 0 : i32
    return %c0_i32, %c0_i32_0 : i32, i32
  }
  func.func @transform_3(%arg0: i32) -> (i32, i32) {
    %c0_i32 = arith.constant 0 : i32
    %c0_i32_0 = arith.constant 0 : i32
    return %c0_i32, %arg0 : i32, i32
  }
}

</mosaic_0001>

<llo_original>
// kernel: tpu_custom_call.1
$region0: #{tpu_custom_call.1}
  #allocation0 [shape = 'u32[]', space=smem, size = 0x4, offset = 0x4, fixed_abs, tag = 'smem constant byte address 0x4 - core index']
  #allocation1 [shape = 'u32[72,128]{1,0:T(1,128)}', space=vmem, size = 0x9000, scoped, tag = 'internal scratch']
  %s0 = inlined_call_operand.vmem [shape: f32[9,256], index: 0, kind: input, shape index: {}]
  %s1 = inlined_call_operand.vmem [shape: f32[9,1], index: 1, kind: input, shape index: {}]
  %s2 = inlined_call_operand.vmem [shape: f32[9,1], index: 2, kind: input, shape index: {}]
  %s3 = inlined_call_operand.hbm [shape: f32[9,256], index: 3, kind: output, shape index: {}]
  %s4 = sld [smem:[#allocation0]]
  $region22: #{tpu_custom_call.1} parent=0
    _
  %s6 = ssub.s32 1, %s4
  %s7 = scalar_select 0, %s6, %s4
  $region1: #{tpu_custom_call.1} parent=0
    #allocation2 [shape = 'u8[16384]{0}', space=vmem, size = 0x4000, scoped, tag = 'output window, operand 0, single buffered']
    #allocation3 [shape = 's32[1]{0}', space=sflag, size = 0x4, scoped, tag = 'scoped memory for tpu_custom_call.1']
    %8 = vsyncpa [#allocation3], 0
    // Predicated region
    $region2: #{tpu_custom_call.1} parent=1 // pred_check
      _
    $region3: #{tpu_custom_call.1} parent=1 // pred_check_branch
      %10 = sbr.rel (0) target = $region5
    $region4: #{tpu_custom_call.1} parent=1 // pred_region
      _
    $region5: #{tpu_custom_call.1} parent=1 // pred_fallthru
      _
    // Predicated region
    $region6: #{tpu_custom_call.1} parent=1 // pred_check
      _
    $region7: #{tpu_custom_call.1} parent=1 // pred_check_branch
      %12 = sbr.rel (0) target = $region9
    $region8: #{tpu_custom_call.1} parent=1 // pred_region
      _
    $region9: #{tpu_custom_call.1} parent=1 // pred_fallthru
      _
    // Predicated region
    $region10: #{tpu_custom_call.1} parent=1 // pred_check
      _
    $region11: #{tpu_custom_call.1} parent=1 // pred_check_branch
      %14 = sbr.rel (0) target = $region13
    $region12: #{tpu_custom_call.1} parent=1 // pred_region
      _
    $region13: #{tpu_custom_call.1} parent=1 // pred_fallthru
      _
    %v15 = vld [vmem:[%s0] sm:$0xff]
    %v16 = vld [vmem:[%s0 + $0x8] sm:$0xff]
    %v17 = vld [vmem:[%s0 + $0x10] sm:$0x1]
    %v18 = vld [vmem:[%s0 + $0x18] sm:$0x1]
    %v19 = vld [vmem:[%s1] sm:$0xff]
    %v20 = vld [vmem:[%s1 + $0x8] sm:$0x1]
    %22 = vset.pattern.permute.xlu0 0
    %23 = vperm.xlu0 %22, %v19
    %v24 = vpop.permute.xlu0 %23
    %27 = vset.pattern.permute.xlu0 0
    %28 = vperm.xlu0 %27, %v20
    %v29 = vpop.permute.xlu0 %28
    %v31 = vmul.f32 %v15, %v24
    %v32 = vmul.f32 %v16, %v24
    %v33 = vmul.f32 %v17, %v29
    %v34 = vmul.f32 %v18, %v29
    %v35 = vld [vmem:[%s2] sm:$0xff]
    %v36 = vld [vmem:[%s2 + $0x8] sm:$0x1]
    %38 = vset.pattern.permute.xlu0 0
    %39 = vperm.xlu0 %38, %v35
    %v40 = vpop.permute.xlu0 %39
    %43 = vset.pattern.permute.xlu0 0
    %44 = vperm.xlu0 %43, %v36
    %v45 = vpop.permute.xlu0 %44
    %v47 = vadd.f32 %v31, %v40
    %v48 = vadd.f32 %v32, %v40
    %v49 = vadd.f32 %v33, %v45
    %v50 = vadd.f32 %v34, %v45
    %51 = vst [vmem:[#allocation2] sm:$0xff] %v47
    %52 = vst [vmem:[#allocation2 + $0x8] sm:$0xff] %v48
    %53 = vst [vmem:[#allocation2 + $0x10] sm:$0x1] %v49
    %54 = vst [vmem:[#allocation2 + $0x18] sm:$0x1] %v50
    // Predicated region
    $region14: #{tpu_custom_call.1} parent=1 // pred_check
      _
    $region15: #{tpu_custom_call.1} parent=1 // pred_check_branch
      %56 = sbr.rel (0) target = $region17
    $region16: #{tpu_custom_call.1} parent=1 // pred_region
      %58 = vsyncadd [#allocation3], 0
      %s59 = sshll.u32 [#allocation2], 4
      %s60 = int_to_ptr.vmem [resolvable:$true] %s59
      %s61 = sshll.u32 %s3, 4
      %s62 = int_to_ptr.hbm [resolvable:$true] %s61
      %67 = dma.vmem_to_hbm [thread:$0]  %s60, 512, %s62, [#allocation3], 256, 256, 16
    $region17: #{tpu_custom_call.1} parent=1 // pred_fallthru
      _
    // Predicated region
    $region18: #{tpu_custom_call.1} parent=1 // pred_check
      _
    $region19: #{tpu_custom_call.1} parent=1 // pred_check_branch
      %69 = sbr.rel (0) target = $region21
    $region20: #{tpu_custom_call.1} parent=1 // pred_region
      %71 = dma.done [#allocation3], 512
    $region21: #{tpu_custom_call.1} parent=1 // pred_fallthru
      _
    %72 = vsyncpa [#allocation3], 1

</llo_original>
